<compile_context>
chip_gen: v5e
topology: v5e:2x2
jax: 0.10.0
libtpu: 0.0.40
codegen_flags: <defaults>
</compile_context>

<pallas_src>
import math

import jax
import jax.numpy as jnp
from jax.experimental import pallas as pl
from jax.experimental.pallas import tpu as pltpu


# -----------------------------------------------------------------------------
# Deterministic sinusoidal tables (mirror PositionalEmbedding / FixedEmbedding)
# -----------------------------------------------------------------------------
def _sinusoid_table(n_rows: int, d_model: int) -> jnp.ndarray:
    pos = jnp.arange(n_rows, dtype=jnp.float32)[:, None]
    div = jnp.exp(jnp.arange(0, d_model, 2, dtype=jnp.float32)
                  * (-(math.log(10000.0) / d_model)))
    t = jnp.zeros((n_rows, d_model), jnp.float32)
    t = t.at[:, 0::2].set(jnp.sin(pos * div))
    t = t.at[:, 1::2].set(jnp.cos(pos * div))
    return t


HOUR_SIZE, WEEKDAY_SIZE, DAY_SIZE, MONTH_SIZE = 24, 7, 32, 13
HOUR_OFF = 0
WEEKDAY_OFF = HOUR_OFF + HOUR_SIZE          # 24
DAY_OFF = WEEKDAY_OFF + WEEKDAY_SIZE        # 31
MONTH_OFF = DAY_OFF + DAY_SIZE              # 63
TABLE_ROWS = 128                            # 24 + 7 + 32 + 13 = 76, padded to lane width


def build_combined_table(d_model: int) -> jnp.ndarray:
    tbl = jnp.concatenate(
        [_sinusoid_table(HOUR_SIZE, d_model),
         _sinusoid_table(WEEKDAY_SIZE, d_model),
         _sinusoid_table(DAY_SIZE, d_model),
         _sinusoid_table(MONTH_SIZE, d_model)], axis=0)
    return jnp.pad(tbl, ((0, TABLE_ROWS - tbl.shape[0]), (0, 0)))


# -----------------------------------------------------------------------------
# Kernel: out_tile = pe_tile + (multi_hot @ combined_table)
# -----------------------------------------------------------------------------
def _embed_kernel(pe_ref, idx_ref, w_ref, o_ref):
    # pe_ref : (TILE_L, D) f32   positional rows of this sequence tile
    # idx_ref: (4, TILE_L) i32   lane-dense combined-table rows (hour/weekday/day/month)
    # w_ref  : (128, D)    f32   concatenated fixed sinusoidal tables (VMEM-resident)
    # o_ref  : (TILE_L, D) f32
    idx = idx_ref[...]                                            # (4, TILE_L)
    tile_l = idx.shape[1]
    row = jax.lax.broadcasted_iota(jnp.int32, (TABLE_ROWS, tile_l), 0)
    # offsets land in disjoint row ranges -> the OR of the four one-hots, multiplied by
    # the table, is exactly the 4-way gather sum.
    hit = ((row == idx[0:1, :]) | (row == idx[1:2, :])
           | (row == idx[2:3, :]) | (row == idx[3:4, :]))         # (128, TILE_L) bool
    multi_hot = jnp.transpose(hit.astype(jnp.float32))            # (TILE_L, 128), XLU
    emb = jnp.dot(multi_hot, w_ref[...], preferred_element_type=jnp.float32)
    o_ref[...] = pe_ref[...] + emb
    # TODO(synk): nn.Dropout(p=0.1) is identity at inference; training-mode stochastic
    # dropout (pltpu.prng_*) intentionally not applied here.
    # Note: for d_model < 128 the output store is a masked (partial-lane) store; real
    # models use d_model that is a multiple of 128, where stores are fully lane-dense.


# -----------------------------------------------------------------------------
# Wrapper
# -----------------------------------------------------------------------------
def _round_up(v: int, m: int) -> int:
    return -(-v // m) * m


def _pick_tile_l(seq_len: int, d_model: int):
    """Lane-aligned (multiple of 128) sequence tile, ~<=2 MiB per (TILE_L, D) f32 block,
    so the double-buffered pipeline fits VMEM on v5e/v6e (128 MiB) and v7x (64 MiB)."""
    cap = ((2 * 1024 * 1024) // max(1, d_model * 4)) // 128 * 128
    cap = max(128, min(1024, cap))
    lp = _round_up(seq_len, 128)
    if lp <= cap:
        return lp, lp                          # single full tile along L
    tile_l, l_pad = cap, _round_up(seq_len, cap)
    for t in range(cap - 128, 127, -128):      # minimize padding waste
        p = _round_up(seq_len, t)
        if p < l_pad:
            tile_l, l_pad = t, p
    return tile_l, l_pad


def make_data_embedding_wo_ve(d_model: int, max_len: int = 5000):
    assert d_model % 2 == 0
    table = build_combined_table(d_model)         # (128, D) fixed temporal tables
    pe_full = _sinusoid_table(max_len, d_model)   # (max_len, D) positional table

    @jax.jit
    def forward(x, x_mark):
        # x: (B, L, c_in)  -- only its sequence length is used ("wo_ve": no value embedding)
        # x_mark: (B, L, >=4) time features, columns [month, day, weekday, hour, ...]
        B, L, _ = x_mark.shape
        assert x.shape[0] == B and x.shape[1] == L and L <= max_len

        tile_l, l_pad = _pick_tile_l(L, d_model)

        # Lane-dense indices, pre-offset into the combined table (clamped for safety).
        xm = x_mark.astype(jnp.int32)
        idx = jnp.stack(
            [jnp.clip(xm[..., 3], 0, HOUR_SIZE - 1) + HOUR_OFF,
             jnp.clip(xm[..., 2], 0, WEEKDAY_SIZE - 1) + WEEKDAY_OFF,
             jnp.clip(xm[..., 1], 0, DAY_SIZE - 1) + DAY_OFF,
             jnp.clip(xm[..., 0], 0, MONTH_SIZE - 1) + MONTH_OFF],
            axis=1)                                                # (B, 4, L)
        if l_pad > L:
            idx = jnp.pad(idx, ((0, 0), (0, 0), (0, l_pad - L)))   # pad rows read table row 0

        if l_pad <= max_len:
            pe = pe_full[:l_pad]
        else:
            pe = jnp.pad(pe_full[:L], ((0, l_pad - L), (0, 0)))

        grid = (l_pad // tile_l, B)   # L tiles outer, batch inner -> pe block is revisited
        out = pl.pallas_call(
            _embed_kernel,
            out_shape=jax.ShapeDtypeStruct((B, l_pad, d_model), jnp.float32),
            grid=grid,
            in_specs=[
                pl.BlockSpec((tile_l, d_model), lambda lt, b: (lt, 0)),       # pe
                pl.BlockSpec((None, 4, tile_l), lambda lt, b: (b, 0, lt)),    # idx (lane-dense)
                pl.BlockSpec((TABLE_ROWS, d_model), lambda lt, b: (0, 0)),    # table (resident)
            ],
            out_specs=pl.BlockSpec((None, tile_l, d_model), lambda lt, b: (b, lt, 0)),
            compiler_params=pltpu.CompilerParams(
                dimension_semantics=("parallel", "parallel"),
                vmem_limit_bytes=32 * 1024 * 1024,
            ),
        )(pe, idx, table)
        return out[:, :L, :]

    return forward


# -----------------------------------------------------------------------------
# Correctness check vs. a plain-JAX reference of the PyTorch forward
# -----------------------------------------------------------------------------
if __name__ == "__main__":
    B, L, D, C_IN = 2, 8, 32, 7
    key = jax.random.PRNGKey(0)
    kx, km, kd, kw, kh = jax.random.split(key, 5)

    x = jax.random.normal(kx, (B, L, C_IN), dtype=jnp.float32)   # values unused by the module
    month = jax.random.randint(km, (B, L), 0, MONTH_SIZE)
    day = jax.random.randint(kd, (B, L), 0, DAY_SIZE)
    weekday = jax.random.randint(kw, (B, L), 0, WEEKDAY_SIZE)
    hour = jax.random.randint(kh, (B, L), 0, HOUR_SIZE)
    x_mark = jnp.stack([month, day, weekday, hour], axis=-1)     # (B, L, 4)

    fwd = make_data_embedding_wo_ve(D)
    out = jax.block_until_ready(fwd(x, x_mark))

    # Reference: pe[:, :L] + hour_emb + weekday_emb + day_emb + month_emb (dropout = identity)
    pe_ref = _sinusoid_table(L, D)[None]                         # (1, L, D)
    xm = x_mark.astype(jnp.int32)
    temporal = (_sinusoid_table(HOUR_SIZE, D)[xm[..., 3]]
                + _sinusoid_table(WEEKDAY_SIZE, D)[xm[..., 2]]
                + _sinusoid_table(DAY_SIZE, D)[xm[..., 1]]
                + _sinusoid_table(MONTH_SIZE, D)[xm[..., 0]])
    ref = pe_ref + temporal

    assert out.shape == (B, L, D)
    assert jnp.allclose(out, ref, atol=1e-5, rtol=1e-5)
    print("KERNEL_OK")
</pallas_src>

<mosaic_0001>
module attributes {stable_mosaic.version = 11 : i64} {
  func.func @_embed_kernel(%arg0: i32, %arg1: i32, %arg2: memref<128x32xf32, #tpu.memory_space<vmem>>, %arg3: memref<1x4x128xi32, #tpu.memory_space<vmem>>, %arg4: memref<128x32xf32, #tpu.memory_space<vmem>>, %arg5: memref<1x128x32xf32, #tpu.memory_space<vmem>>) attributes {dimension_semantics = [#tpu.dimension_semantics<parallel>, #tpu.dimension_semantics<parallel>], iteration_bounds = array<i64: 1, 2>, scalar_prefetch = 0 : i64, scratch_operands = 0 : i64, tpu.core_type = #tpu.core_type<tc>, window_params = [{transform_indices = @transform_0, window_bounds = array<i64: 128, 32>}, {transform_indices = @transform_1, window_bounds = array<i64: 1, 4, 128>}, {pipeline_mode = #tpu.pipeline_mode<synchronous>, transform_indices = @transform_2, window_bounds = array<i64: 128, 32>}, {transform_indices = @transform_3, window_bounds = array<i64: 1, 128, 32>}]} {
    %c0 = arith.constant 0 : index
    %c0_0 = arith.constant 0 : index
    %c0_1 = arith.constant 0 : index
    %0 = vector.load %arg3[%c0, %c0_0, %c0_1] : memref<1x4x128xi32, #tpu.memory_space<vmem>>, vector<1x4x128xi32>
    %1 = vector.shape_cast %0 : vector<1x4x128xi32> to vector<4x128xi32>
    %2 = tpu.iota {dimensions = array<i32: 0>} : vector<128x128xi32>
    %3 = vector.extract_strided_slice %1 {offsets = [0, 0], sizes = [1, 128], strides = [1, 1]} : vector<4x128xi32> to vector<1x128xi32>
    %4 = vector.broadcast %3 : vector<1x128xi32> to vector<128x128xi32>
    %5 = arith.cmpi eq, %2, %4 : vector<128x128xi32>
    %6 = vector.extract_strided_slice %1 {offsets = [1, 0], sizes = [1, 128], strides = [1, 1]} : vector<4x128xi32> to vector<1x128xi32>
    %7 = vector.broadcast %6 : vector<1x128xi32> to vector<128x128xi32>
    %8 = arith.cmpi eq, %2, %7 : vector<128x128xi32>
    %9 = arith.ori %5, %8 : vector<128x128xi1>
    %10 = vector.extract_strided_slice %1 {offsets = [2, 0], sizes = [1, 128], strides = [1, 1]} : vector<4x128xi32> to vector<1x128xi32>
    %11 = vector.broadcast %10 : vector<1x128xi32> to vector<128x128xi32>
    %12 = arith.cmpi eq, %2, %11 : vector<128x128xi32>
    %13 = arith.ori %9, %12 : vector<128x128xi1>
    %14 = vector.extract_strided_slice %1 {offsets = [3, 0], sizes = [1, 128], strides = [1, 1]} : vector<4x128xi32> to vector<1x128xi32>
    %15 = vector.broadcast %14 : vector<1x128xi32> to vector<128x128xi32>
    %16 = arith.cmpi eq, %2, %15 : vector<128x128xi32>
    %17 = arith.ori %13, %16 : vector<128x128xi1>
    %18 = arith.extui %17 : vector<128x128xi1> to vector<128x128xi32>
    %19 = arith.sitofp %18 : vector<128x128xi32> to vector<128x128xf32>
    %20 = tpu.transpose %19, [1, 0] : vector<128x128xf32> -> vector<128x128xf32>
    %c0_2 = arith.constant 0 : index
    %c0_3 = arith.constant 0 : index
    %21 = vector.load %arg4[%c0_2, %c0_3] : memref<128x32xf32, #tpu.memory_space<vmem>>, vector<128x32xf32>
    %cst = arith.constant dense<0.000000e+00> : vector<128x32xf32>
    %22 = tpu.matmul %20, %21, %cst {dimension_numbers = #tpu.dot_dimension_numbers<[1], [0], [0], [1], [0, 0, 1, 1], [], []>} : vector<128x128xf32>, vector<128x32xf32>, vector<128x32xf32> -> vector<128x32xf32>
    %c0_4 = arith.constant 0 : index
    %c0_5 = arith.constant 0 : index
    %23 = vector.load %arg2[%c0_4, %c0_5] : memref<128x32xf32, #tpu.memory_space<vmem>>, vector<128x32xf32>
    %24 = arith.addf %23, %22 : vector<128x32xf32>
    %c0_6 = arith.constant 0 : index
    %c0_7 = arith.constant 0 : index
    %c0_8 = arith.constant 0 : index
    %25 = vector.load %arg5[%c0_6, %c0_7, %c0_8] : memref<1x128x32xf32, #tpu.memory_space<vmem>>, vector<1x128x32xf32>
    %26 = vector.shape_cast %25 : vector<1x128x32xf32> to vector<128x32xf32>
    %27 = vector.shape_cast %24 : vector<128x32xf32> to vector<1x128x32xf32>
    tpu.vector_store %arg5[%c0_6, %c0_7, %c0_8], %27 {strides = array<i32>} : memref<1x128x32xf32, #tpu.memory_space<vmem>>, vector<1x128x32xf32>,
    return
  }
  func.func @transform_0(%arg0: i32, %arg1: i32) -> (i32, i32) {
    %c0_i32 = arith.constant 0 : i32
    %c0_i32_0 = arith.constant 0 : i32
    return %arg0, %c0_i32 : i32, i32
  }
  func.func @transform_1(%arg0: i32, %arg1: i32) -> (i32, i32, i32) {
    %c0_i32 = arith.constant 0 : i32
    %c0_i32_0 = arith.constant 0 : i32
    return %arg1, %c0_i32, %arg0 : i32, i32, i32
  }
  func.func @transform_2(%arg0: i32, %arg1: i32) -> (i32, i32) {
    %c0_i32 = arith.constant 0 : i32
    %c0_i32_0 = arith.constant 0 : i32
    %c0_i32_1 = arith.constant 0 : i32
    return %c0_i32, %c0_i32_0 : i32, i32
  }
  func.func @transform_3(%arg0: i32, %arg1: i32) -> (i32, i32, i32) {
    %c0_i32 = arith.constant 0 : i32
    %c0_i32_0 = arith.constant 0 : i32
    return %arg1, %arg0, %c0_i32 : i32, i32, i32
  }
}

</mosaic_0001>

<llo_original>
// kernel: forward.1
$region0: #{forward.1}
  #allocation0 [shape = 'u32[]', space=smem, size = 0x4, offset = 0x4, fixed_abs, tag = 'smem constant byte address 0x4 - core index']
  #allocation1 [shape = 'u32[72,128]{1,0:T(1,128)}', space=vmem, size = 0x9000, scoped, tag = 'internal scratch']
  %s0 = inlined_call_operand.hbm [shape: f32[128,32], index: 0, kind: input, shape index: {}]
  %s1 = inlined_call_operand.vmem [shape: s32[2,4,128], index: 1, kind: input, shape index: {}]
  %s2 = inlined_call_operand.hbm [shape: f32[128,32], index: 2, kind: input, shape index: {}]
  %s3 = inlined_call_operand.vmem [shape: f32[2,128,32], index: 3, kind: output, shape index: {}]
  %s4 = sld [smem:[#allocation0]]
  $region53: #{forward.1} parent=0
    _
  %s6 = ssub.s32 1, %s4
  %s7 = scalar_select 0, %s6, %s4
  $region1: #{forward.1} parent=0
    #allocation2 [shape = 'u8[65536]{0}', space=vmem, size = 0x10000, scoped, tag = 'input window, operand 0, single buffered']
    #allocation3 [shape = 's32[2]{0}', space=sflag, size = 0x8, scoped, tag = 'scoped memory for forward.1']
    #allocation4 [shape = 'u8[65536]{0}', space=vmem, size = 0x10000, scoped, tag = 'input window, operand 2, single buffered']
    #allocation5 [shape = 's32[1]{0}', space=sflag, size = 0x4, scoped, tag = 'scoped memory for forward.1']
    %8 = vsyncpa [#allocation3], 0
    %9 = vsyncpa [#allocation5], 0
    loop: start=0, step=1, limit=4
    $region2: #{forward.1} parent=1 // loop_pre_header
      _
    $region3: #{forward.1} parent=1 // loop_header
      %s11 = sphi 0, %s15
      %p12 = scmp.ge.s32.totalorder %s11, 4
      %s18 = sphi 0, %s30
      %s19 = sphi 0, %s26
      %s20 = sphi 0, %s18
      %s21 = sphi 0, %s19
      %s22 = sphi 0, %s20
      %s23 = sphi 0, %s21
      %s33 = sphi 0, %s35
      %s36 = sphi 0, %s33
      %s37 = sphi 0, %s36
      %s53 = sphi 0, %s37
      %s61 = sphi 0, %s63
      %s64 = sphi 0, %s61
      %s65 = sphi 0, %s64
      %s81 = sphi 0, %s65
      %s85 = sphi 0, %s85
      %s87 = sphi 0, %s85
      %s88 = sphi 0, %s87
      %s102 = sphi 0, %s88
      %s110 = sphi 0, %s112
      %s113 = sphi 0, %s110
      %s114 = sphi 0, %s113
      %s130 = sphi 0, %s114
    $region4: #{forward.1} parent=1 // loop_header_branch
      %14 = sbr.rel (%p12) target = $region8
    $region5: #{forward.1} parent=1 // loop_body
      %s16 = ssub.s32 %s11, 1
      %s17 = ssub.s32 %s11, 2
      %s24 = sadd.s32 1, %s19
      %p25 = scmp.ge.s32.totalorder %s24, 2
      %s26 = scalar_select %p25, 0, %s24
      %s27 = sadd.s32 1, %s18
      %s28 = scalar_select %p25, %s27, %s18
      %p29 = scmp.ge.s32.totalorder %s28, 1
      %s30 = scalar_select %p29, 0, %s28
      %s31 = ssub.s32 %s18, %s30
      %p32 = scmp.eq.s32.totalorder %s31, 0
      %s34 = sadd.s32 %s33, 1
      %s35 = scalar_select %p32, %s33, %s34
      %p38 = pneg %p32
      %p39 = scmp.eq.s32.totalorder %s11, 1
      %p40 = por %p38, %p39
      %p41 = scmp.ne.s32.totalorder %s33, %s36
      %p42 = scmp.eq.s32.totalorder %s11, 0
      %p43 = por %p41, %p42
      %p44 = scmp.ne.s32.totalorder %s33, %s36
      %p45 = scmp.eq.s32.totalorder %s16, 1
      %p46 = por %p44, %p45
      %p47 = scmp.ne.s32.totalorder %s36, %s37
      %p48 = scmp.eq.s32.totalorder %s16, 0
      %p49 = por %p47, %p48
      %p50 = scmp.ne.s32.totalorder %s36, %s37
      %p51 = scmp.eq.s32.totalorder %s17, 1
      %p52 = por %p50, %p51
      %p54 = scmp.ne.s32.totalorder %s37, %s53
      %p55 = scmp.eq.s32.totalorder %s17, 0
      %p56 = por %p54, %p55
      %s57 = ssub.s32 %s19, %s26
      %s58 = ssub.s32 %s18, %s30
      %s59 = sor.u32 %s57, %s58
      %p60 = scmp.eq.s32.totalorder %s59, 0
      %s62 = sadd.s32 %s61, 1
      %s63 = scalar_select %p60, %s61, %s62
      %p66 = pneg %p60
      %p67 = scmp.eq.s32.totalorder %s11, 1
      %p68 = por %p66, %p67
      %p69 = scmp.ne.s32.totalorder %s61, %s64
      %p70 = scmp.eq.s32.totalorder %s11, 0
      %p71 = por %p69, %p70
      %p72 = scmp.ne.s32.totalorder %s61, %s64
      %p73 = scmp.eq.s32.totalorder %s16, 1
      %p74 = por %p72, %p73
      %p75 = scmp.ne.s32.totalorder %s64, %s65
      %p76 = scmp.eq.s32.totalorder %s16, 0
      %p77 = por %p75, %p76
      %p78 = scmp.ne.s32.totalorder %s64, %s65
      %p79 = scmp.eq.s32.totalorder %s17, 1
      %p80 = por %p78, %p79
      %p82 = scmp.ne.s32.totalorder %s65, %s81
      %p83 = scmp.eq.s32.totalorder %s17, 0
      %p84 = por %p82, %p83
      %s86 = sadd.s32 %s85, 1
      %p89 = scmp.eq.s32.totalorder %s11, 1
      %p90 = scmp.ne.s32.totalorder %s85, %s87
      %p91 = scmp.eq.s32.totalorder %s11, 0
      %p92 = por %p90, %p91
      %p93 = scmp.ne.s32.totalorder %s85, %s87
      %p94 = scmp.eq.s32.totalorder %s16, 1
      %p95 = por %p93, %p94
      %p96 = scmp.ne.s32.totalorder %s87, %s88
      %p97 = scmp.eq.s32.totalorder %s16, 0
      %p98 = por %p96, %p97
      %p99 = scmp.ne.s32.totalorder %s87, %s88
      %p100 = scmp.eq.s32.totalorder %s17, 1
      %p101 = por %p99, %p100
      %p103 = scmp.ne.s32.totalorder %s88, %s102
      %p104 = scmp.eq.s32.totalorder %s17, 0
      %p105 = por %p103, %p104
      %s106 = ssub.s32 %s19, %s26
      %s107 = ssub.s32 %s18, %s30
      %s108 = sor.u32 %s106, %s107
      %p109 = scmp.eq.s32.totalorder %s108, 0
      %s111 = sadd.s32 %s110, 1
      %s112 = scalar_select %p109, %s110, %s111
      %p115 = pneg %p109
      %p116 = scmp.eq.s32.totalorder %s11, 1
      %p117 = por %p115, %p116
      %p118 = scmp.ne.s32.totalorder %s110, %s113
      %p119 = scmp.eq.s32.totalorder %s11, 0
      %p120 = por %p118, %p119
      %p121 = scmp.ne.s32.totalorder %s110, %s113
      %p122 = scmp.eq.s32.totalorder %s16, 1
      %p123 = por %p121, %p122
      %p124 = scmp.ne.s32.totalorder %s113, %s114
      %p125 = scmp.eq.s32.totalorder %s16, 0
      %p126 = por %p124, %p125
      %p127 = scmp.ne.s32.totalorder %s113, %s114
      %p128 = scmp.eq.s32.totalorder %s17, 1
      %p129 = por %p127, %p128
      %p131 = scmp.ne.s32.totalorder %s114, %s130
      %p132 = scmp.eq.s32.totalorder %s17, 0
      %p133 = por %p131, %p132
      %p134 = scmp.le.s32.totalorder 1, %s11
      %p135 = scmp.lt.s32.totalorder %s11, 3
      %p136 = pnand %p134, %p135
      %p137 = pneg %p136
      // Predicated region
      $region9: #{forward.1} parent=5 // pred_check
        _
      $region10: #{forward.1} parent=5 // pred_check_branch
        %139 = sbr.rel (%p136) target = $region12
      $region11: #{forward.1} parent=5 // pred_region
        %s140 = ssub.s32 %s11, 1
        // Predicated region
        $region13: #{forward.1} parent=11 // pred_check
          %p141 = pneg %p49
        $region14: #{forward.1} parent=11 // pred_check_branch
          %143 = sbr.rel (%p141) target = $region16
        $region15: #{forward.1} parent=11 // pred_region
          %s144 = smul.u32 16, %s20
          %146 = vsyncadd [#allocation3], 0
          %s147 = smul.addr %s144, 8
          %s148 = scalar_lea.hbm %s0, %s147
          %s149 = sshll.u32 %s148, 4
          %s150 = int_to_ptr.hbm [resolvable:$true] %s149
          %s151 = sshll.u32 [#allocation2], 4
          %s152 = int_to_ptr.vmem [resolvable:$true] %s151
          %157 = dma.hbm_to_vmem [thread:$0]  %s150, 2048, %s152, [#allocation3], 128, 128, 8
        $region16: #{forward.1} parent=11 // pred_fallthru
          _
        // Predicated region
        $region17: #{forward.1} parent=11 // pred_check
          %p158 = pneg %p98
        $region18: #{forward.1} parent=11 // pred_check_branch
          %160 = sbr.rel (%p158) target = $region20
        $region19: #{forward.1} parent=11 // pred_region
          %162 = vsyncadd [#allocation5], 0
          %s163 = sshll.u32 %s2, 4
          %s164 = int_to_ptr.hbm [resolvable:$true] %s163
          %s165 = sshll.u32 [#allocation4], 4
          %s166 = int_to_ptr.vmem [resolvable:$true] %s165
          %171 = dma.hbm_to_vmem [thread:$0]  %s164, 2048, %s166, [#allocation5], 128, 128, 8
        $region20: #{forward.1} parent=11 // pred_fallthru
          _
      $region12: #{forward.1} parent=5 // pred_fallthru
        _
      %p172 = scmp.lt.s32.totalorder %s11, 2
      // Predicated region
      $region21: #{forward.1} parent=5 // pred_check
        %p173 = pneg %p172
      $region22: #{forward.1} parent=5 // pred_check_branch
        %175 = sbr.rel (%p173) target = $region24
      $region23: #{forward.1} parent=5 // pred_region
        // Predicated region
        $region25: #{forward.1} parent=23 // pred_check
          %p176 = pneg %p71
        $region26: #{forward.1} parent=23 // pred_check_branch
          %178 = sbr.rel (%p176) target = $region28
        $region27: #{forward.1} parent=23 // pred_region
          %p179 = scmp.lt.s32.totalorder %s19, 1
          %s180 = scalar_select %p179, %s19, 1
          %p181 = scmp.lt.s32.totalorder %s18, 0
          %s182 = scalar_select %p181, %s18, 0
          %s183 = sadd.s32 %s182, %s180
          %s184 = smul.addr %s183, 4
          %s185 = scalar_lea.vmem %s1, %s184
        $region28: #{forward.1} parent=23 // pred_fallthru
          _
      $region24: #{forward.1} parent=5 // pred_fallthru
        _
      %p186 = scmp.le.s32.totalorder 1, %s11
      %p187 = scmp.lt.s32.totalorder %s11, 3
      %p188 = pnand %p186, %p187
      %p189 = pneg %p188
      // Predicated region
      $region29: #{forward.1} parent=5 // pred_check
        _
      $region30: #{forward.1} parent=5 // pred_check_branch
        %191 = sbr.rel (%p188) target = $region32
      $region31: #{forward.1} parent=5 // pred_region
        %s192 = ssub.s32 %s11, 1
        // Predicated region
        $region33: #{forward.1} parent=31 // pred_check
          %p193 = pneg %p49
        $region34: #{forward.1} parent=31 // pred_check_branch
          %195 = sbr.rel (%p193) target = $region36
        $region35: #{forward.1} parent=31 // pred_region
          %197 = dma.done [#allocation3], 2048
        $region36: #{forward.1} parent=31 // pred_fallthru
          _
        // Predicated region
        $region37: #{forward.1} parent=31 // pred_check
          %p198 = pneg %p98
        $region38: #{forward.1} parent=31 // pred_check_branch
          %200 = sbr.rel (%p198) target = $region40
        $region39: #{forward.1} parent=31 // pred_region
          %202 = dma.done [#allocation5], 2048
        $region40: #{forward.1} parent=31 // pred_fallthru
          _
        %p203 = pneg %p49
        %p204 = pneg %p46
        %p205 = scmp.lt.s32.totalorder %s21, 1
        %s206 = scalar_select %p205, %s21, 1
        %p207 = scmp.lt.s32.totalorder %s20, 0
        %s208 = scalar_select %p207, %s20, 0
        %s209 = sadd.s32 %s208, %s206
        %s210 = smul.addr %s209, 4
        %s211 = scalar_lea.vmem %s1, %s210
        %p212 = pneg %p77
        %p213 = pneg %p74
        %p214 = pneg %p98
        %p215 = pneg %p95
        %p216 = pneg %p126
        %p217 = pneg %p123
        %s218 = smul.u32 16, %s20
        %p219 = scmp.lt.s32.totalorder %s21, 1
        %s220 = scalar_select %p219, %s21, 1
        %p221 = scmp.lt.s32.totalorder %s218, 15
        %s222 = scalar_select %p221, %s218, 15
        %s223 = smul.addr %s220, 16
        %s224 = sadd.s32 %s222, %s223
        %s225 = smul.addr %s224, 8
        %s226 = scalar_lea.vmem %s3, %s225
        %s227 = smul.u32 16, %s20
        %p228 = scmp.lt.s32.totalorder %s21, 1
        %s229 = scalar_select %p228, %s21, 1
        %p230 = scmp.lt.s32.totalorder %s20, 0
        %s231 = scalar_select %p230, %s20, 0
        %s232 = sadd.s32 %s231, %s229
        %s233 = smul.addr %s232, 4
        %s234 = scalar_lea.vmem %s1, %s233
        %s235 = smul.u32 16, %s20
        %p236 = scmp.lt.s32.totalorder %s21, 1
        %s237 = scalar_select %p236, %s21, 1
        %p238 = scmp.lt.s32.totalorder %s235, 15
        %s239 = scalar_select %p238, %s235, 15
        %s240 = smul.addr %s237, 16
        %s241 = sadd.s32 %s239, %s240
        %s242 = smul.addr %s241, 8
        %s243 = scalar_lea.vmem %s3, %s242
        %s244 = smul.u32 16, %s20
        %v245 = vld [vmem:[%s234] sm:$0xf]
        %v246 = vlaneseq
        %v247 = vshrl.u32 %v246, 7
        %v248 = vadd.s32 %v247, 8
        %v249 = vadd.s32 %v247, 16
        %v250 = vadd.s32 %v247, 24
        %v251 = vadd.s32 %v247, 32
        %v252 = vadd.s32 %v247, 40
        %v253 = vadd.s32 %v247, 48
        %v254 = vadd.s32 %v247, 56
        %v255 = vadd.s32 %v247, 64
        %v256 = vadd.s32 %v247, 72
        %v257 = vadd.s32 %v247, 80
        %v258 = vadd.s32 %v247, 88
        %v259 = vadd.s32 %v247, 96
        %v260 = vadd.s32 %v247, 104
        %v261 = vadd.s32 %v247, 112
        %v262 = vadd.s32 %v247, 120
        %v263 = vperm.slane %v245, 0
        %vm264 = vcmp.eq.s32.totalorder %v247, %v263
        %vm265 = vcmp.eq.s32.totalorder %v248, %v263
        %vm266 = vcmp.eq.s32.totalorder %v249, %v263
        %vm267 = vcmp.eq.s32.totalorder %v250, %v263
        %vm268 = vcmp.eq.s32.totalorder %v251, %v263
        %vm269 = vcmp.eq.s32.totalorder %v252, %v263
        %vm270 = vcmp.eq.s32.totalorder %v253, %v263
        %vm271 = vcmp.eq.s32.totalorder %v254, %v263
        %vm272 = vcmp.eq.s32.totalorder %v255, %v263
        %vm273 = vcmp.eq.s32.totalorder %v256, %v263
        %vm274 = vcmp.eq.s32.totalorder %v257, %v263
        %vm275 = vcmp.eq.s32.totalorder %v258, %v263
        %vm276 = vcmp.eq.s32.totalorder %v259, %v263
        %vm277 = vcmp.eq.s32.totalorder %v260, %v263
        %vm278 = vcmp.eq.s32.totalorder %v261, %v263
        %vm279 = vcmp.eq.s32.totalorder %v262, %v263
        %v280 = vperm.slane %v245, 1
        %vm281 = vcmp.eq.s32.totalorder %v247, %v280
        %vm282 = vcmp.eq.s32.totalorder %v248, %v280
        %vm283 = vcmp.eq.s32.totalorder %v249, %v280
        %vm284 = vcmp.eq.s32.totalorder %v250, %v280
        %vm285 = vcmp.eq.s32.totalorder %v251, %v280
        %vm286 = vcmp.eq.s32.totalorder %v252, %v280
        %vm287 = vcmp.eq.s32.totalorder %v253, %v280
        %vm288 = vcmp.eq.s32.totalorder %v254, %v280
        %vm289 = vcmp.eq.s32.totalorder %v255, %v280
        %vm290 = vcmp.eq.s32.totalorder %v256, %v280
        %vm291 = vcmp.eq.s32.totalorder %v257, %v280
        %vm292 = vcmp.eq.s32.totalorder %v258, %v280
        %vm293 = vcmp.eq.s32.totalorder %v259, %v280
        %vm294 = vcmp.eq.s32.totalorder %v260, %v280
        %vm295 = vcmp.eq.s32.totalorder %v261, %v280
        %vm296 = vcmp.eq.s32.totalorder %v262, %v280
        %vm297 = vmor %vm264, %vm281
        %vm298 = vmor %vm265, %vm282
        %vm299 = vmor %vm266, %vm283
        %vm300 = vmor %vm267, %vm284
        %vm301 = vmor %vm268, %vm285
        %vm302 = vmor %vm269, %vm286
        %vm303 = vmor %vm270, %vm287
        %vm304 = vmor %vm271, %vm288
        %vm305 = vmor %vm272, %vm289
        %vm306 = vmor %vm273, %vm290
        %vm307 = vmor %vm274, %vm291
        %vm308 = vmor %vm275, %vm292
        %vm309 = vmor %vm276, %vm293
        %vm310 = vmor %vm277, %vm294
        %vm311 = vmor %vm278, %vm295
        %vm312 = vmor %vm279, %vm296
        %v313 = vperm.slane %v245, 2
        %vm314 = vcmp.eq.s32.totalorder %v247, %v313
        %vm315 = vcmp.eq.s32.totalorder %v248, %v313
        %vm316 = vcmp.eq.s32.totalorder %v249, %v313
        %vm317 = vcmp.eq.s32.totalorder %v250, %v313
        %vm318 = vcmp.eq.s32.totalorder %v251, %v313
        %vm319 = vcmp.eq.s32.totalorder %v252, %v313
        %vm320 = vcmp.eq.s32.totalorder %v253, %v313
        %vm321 = vcmp.eq.s32.totalorder %v254, %v313
        %vm322 = vcmp.eq.s32.totalorder %v255, %v313
        %vm323 = vcmp.eq.s32.totalorder %v256, %v313
        %vm324 = vcmp.eq.s32.totalorder %v257, %v313
        %vm325 = vcmp.eq.s32.totalorder %v258, %v313
        %vm326 = vcmp.eq.s32.totalorder %v259, %v313
        %vm327 = vcmp.eq.s32.totalorder %v260, %v313
        %vm328 = vcmp.eq.s32.totalorder %v261, %v313
        %vm329 = vcmp.eq.s32.totalorder %v262, %v313
        %vm330 = vmor %vm297, %vm314
        %vm331 = vmor %vm298, %vm315
        %vm332 = vmor %vm299, %vm316
        %vm333 = vmor %vm300, %vm317
        %vm334 = vmor %vm301, %vm318
        %vm335 = vmor %vm302, %vm319
        %vm336 = vmor %vm303, %vm320
        %vm337 = vmor %vm304, %vm321
        %vm338 = vmor %vm305, %vm322
        %vm339 = vmor %vm306, %vm323
        %vm340 = vmor %vm307, %vm324
        %vm341 = vmor %vm308, %vm325
        %vm342 = vmor %vm309, %vm326
        %vm343 = vmor %vm310, %vm327
        %vm344 = vmor %vm311, %vm328
        %vm345 = vmor %vm312, %vm329
        %v346 = vperm.slane %v245, 3
        %vm347 = vcmp.eq.s32.totalorder %v247, %v346
        %vm348 = vcmp.eq.s32.totalorder %v248, %v346
        %vm349 = vcmp.eq.s32.totalorder %v249, %v346
        %vm350 = vcmp.eq.s32.totalorder %v250, %v346
        %vm351 = vcmp.eq.s32.totalorder %v251, %v346
        %vm352 = vcmp.eq.s32.totalorder %v252, %v346
        %vm353 = vcmp.eq.s32.totalorder %v253, %v346
        %vm354 = vcmp.eq.s32.totalorder %v254, %v346
        %vm355 = vcmp.eq.s32.totalorder %v255, %v346
        %vm356 = vcmp.eq.s32.totalorder %v256, %v346
        %vm357 = vcmp.eq.s32.totalorder %v257, %v346
        %vm358 = vcmp.eq.s32.totalorder %v258, %v346
        %vm359 = vcmp.eq.s32.totalorder %v259, %v346
        %vm360 = vcmp.eq.s32.totalorder %v260, %v346
        %vm361 = vcmp.eq.s32.totalorder %v261, %v346
        %vm362 = vcmp.eq.s32.totalorder %v262, %v346
        %vm363 = vmor %vm330, %vm347
        %vm364 = vmor %vm331, %vm348
        %vm365 = vmor %vm332, %vm349
        %vm366 = vmor %vm333, %vm350
        %vm367 = vmor %vm334, %vm351
        %vm368 = vmor %vm335, %vm352
        %vm369 = vmor %vm336, %vm353
        %vm370 = vmor %vm337, %vm354
        %vm371 = vmor %vm338, %vm355
        %vm372 = vmor %vm339, %vm356
        %vm373 = vmor %vm340, %vm357
        %vm374 = vmor %vm341, %vm358
        %vm375 = vmor %vm342, %vm359
        %vm376 = vmor %vm343, %vm360
        %vm377 = vmor %vm344, %vm361
        %vm378 = vmor %vm345, %vm362
        %v379 = vsel %vm363, 1, 0
        %v380 = vsel %vm364, 1, 0
        %v381 = vsel %vm365, 1, 0
        %v382 = vsel %vm366, 1, 0
        %v383 = vsel %vm367, 1, 0
        %v384 = vsel %vm368, 1, 0
        %v385 = vsel %vm369, 1, 0
        %v386 = vsel %vm370, 1, 0
        %v387 = vsel %vm371, 1, 0
        %v388 = vsel %vm372, 1, 0
        %v389 = vsel %vm373, 1, 0
        %v390 = vsel %vm374, 1, 0
        %v391 = vsel %vm375, 1, 0
        %v392 = vsel %vm376, 1, 0
        %v393 = vsel %vm377, 1, 0
        %v394 = vsel %vm378, 1, 0
        %v395 = vcvt.s32.f32 %v379
        %v396 = vcvt.s32.f32 %v380
        %v397 = vcvt.s32.f32 %v381
        %v398 = vcvt.s32.f32 %v382
        %v399 = vcvt.s32.f32 %v383
        %v400 = vcvt.s32.f32 %v384
        %v401 = vcvt.s32.f32 %v385
        %v402 = vcvt.s32.f32 %v386
        %v403 = vcvt.s32.f32 %v387
        %v404 = vcvt.s32.f32 %v388
        %v405 = vcvt.s32.f32 %v389
        %v406 = vcvt.s32.f32 %v390
        %v407 = vcvt.s32.f32 %v391
        %v408 = vcvt.s32.f32 %v392
        %v409 = vcvt.s32.f32 %v393
        %v410 = vcvt.s32.f32 %v394
        %411 = vxpose.xlu0.b32.start [1/16] %v395, 128
        %412 = vxpose.xlu0.b32.cont [2/16] %v396, 128
        %413 = vxpose.xlu0.b32.cont [3/16] %v397, 128
        %414 = vxpose.xlu0.b32.cont [4/16] %v398, 128
        %415 = vxpose.xlu0.b32.cont [5/16] %v399, 128
        %416 = vxpose.xlu0.b32.cont [6/16] %v400, 128
        %417 = vxpose.xlu0.b32.cont [7/16] %v401, 128
        %418 = vxpose.xlu0.b32.cont [8/16] %v402, 128
        %419 = vxpose.xlu0.b32.cont [9/16] %v403, 128
        %420 = vxpose.xlu0.b32.cont [10/16] %v404, 128
        %421 = vxpose.xlu0.b32.cont [11/16] %v405, 128
        %422 = vxpose.xlu0.b32.cont [12/16] %v406, 128
        %423 = vxpose.xlu0.b32.cont [13/16] %v407, 128
        %424 = vxpose.xlu0.b32.cont [14/16] %v408, 128
        %425 = vxpose.xlu0.b32.cont [15/16] %v409, 128
        %426 = vxpose.xlu0.b32.end [16/16] %v410, 128
        %v427 = vpop.trf.xlu0
        %v428 = vpop.trf.xlu0
        %v429 = vpop.trf.xlu0
        %v430 = vpop.trf.xlu0
        %v431 = vpop.trf.xlu0
        %v432 = vpop.trf.xlu0
        %v433 = vpop.trf.xlu0
        %v434 = vpop.trf.xlu0
        %v435 = vpop.trf.xlu0
        %v436 = vpop.trf.xlu0
        %v437 = vpop.trf.xlu0
        %v438 = vpop.trf.xlu0
        %v439 = vpop.trf.xlu0
        %v440 = vpop.trf.xlu0
        %v441 = vpop.trf.xlu0
        %v442 = vpop.trf.xlu0
        %v443 = vld [vmem:[#allocation4] sm:$0xff]
        %v444 = vld [vmem:[#allocation4 + $0x8] sm:$0xff]
        %v445 = vld [vmem:[#allocation4 + $0x10] sm:$0xff]
        %v446 = vld [vmem:[#allocation4 + $0x18] sm:$0xff]
        %v447 = vld [vmem:[#allocation4 + $0x20] sm:$0xff]
        %v448 = vld [vmem:[#allocation4 + $0x28] sm:$0xff]
        %v449 = vld [vmem:[#allocation4 + $0x30] sm:$0xff]
        %v450 = vld [vmem:[#allocation4 + $0x38] sm:$0xff]
        %v451 = vld [vmem:[#allocation4 + $0x40] sm:$0xff]
        %v452 = vld [vmem:[#allocation4 + $0x48] sm:$0xff]
        %v453 = vld [vmem:[#allocation4 + $0x50] sm:$0xff]
        %v454 = vld [vmem:[#allocation4 + $0x58] sm:$0xff]
        %v455 = vld [vmem:[#allocation4 + $0x60] sm:$0xff]
        %v456 = vld [vmem:[#allocation4 + $0x68] sm:$0xff]
        %v457 = vld [vmem:[#allocation4 + $0x70] sm:$0xff]
        %v458 = vld [vmem:[#allocation4 + $0x78] sm:$0xff]
        %459 = vmatpush.msra.mxu0 %v458
        %460 = vmatpush.msra.mxu0 %v457
        %461 = vmatpush.msra.mxu0 %v456
        %462 = vmatpush.msra.mxu0 %v455
        %463 = vmatpush.msra.mxu0 %v454
        %464 = vmatpush.msra.mxu0 %v453
        %465 = vmatpush.msra.mxu0 %v452
        %466 = vmatpush.msra.mxu0 %v451
        %467 = vmatpush.msra.mxu0 %v450
        %468 = vmatpush.msra.mxu0 %v449
        %469 = vmatpush.msra.mxu0 %v448
        %470 = vmatpush.msra.mxu0 %v447
        %471 = vmatpush.msra.mxu0 %v446
        %472 = vmatpush.msra.mxu0 %v445
        %473 = vmatpush.msra.mxu0 %v444
        %474 = vmatpush.msra.mxu0 %v443
        %475 = vmatmul.f32.gmra.mxu0 %v427
        %v476 = vpop.f32.mrf.mxu0
        %v477 = vadd.f32 0.0, %v476
        %478 = vmatmul.f32.gmra.mxu0 %v428
        %v479 = vpop.f32.mrf.mxu0
        %v480 = vadd.f32 0.0, %v479
        %481 = vmatmul.f32.gmra.mxu0 %v429
        %v482 = vpop.f32.mrf.mxu0
        %v483 = vadd.f32 0.0, %v482
        %484 = vmatmul.f32.gmra.mxu0 %v430
        %v485 = vpop.f32.mrf.mxu0
        %v486 = vadd.f32 0.0, %v485
        %487 = vmatmul.f32.gmra.mxu0 %v431
        %v488 = vpop.f32.mrf.mxu0
        %v489 = vadd.f32 0.0, %v488
        %490 = vmatmul.f32.gmra.mxu0 %v432
        %v491 = vpop.f32.mrf.mxu0
        %v492 = vadd.f32 0.0, %v491
        %493 = vmatmul.f32.gmra.mxu0 %v433
        %v494 = vpop.f32.mrf.mxu0
        %v495 = vadd.f32 0.0, %v494
        %496 = vmatmul.f32.gmra.mxu0 %v434
        %v497 = vpop.f32.mrf.mxu0
        %v498 = vadd.f32 0.0, %v497
        %499 = vmatmul.f32.gmra.mxu0 %v435
        %v500 = vpop.f32.mrf.mxu0
        %v501 = vadd.f32 0.0, %v500
        %502 = vmatmul.f32.gmra.mxu0 %v436
        %v503 = vpop.f32.mrf.mxu0
        %v504 = vadd.f32 0.0, %v503
        %505 = vmatmul.f32.gmra.mxu0 %v437
        %v506 = vpop.f32.mrf.mxu0
        %v507 = vadd.f32 0.0, %v506
        %508 = vmatmul.f32.gmra.mxu0 %v438
        %v509 = vpop.f32.mrf.mxu0
        %v510 = vadd.f32 0.0, %v509
        %511 = vmatmul.f32.gmra.mxu0 %v439
        %v512 = vpop.f32.mrf.mxu0
        %v513 = vadd.f32 0.0, %v512
        %514 = vmatmul.f32.gmra.mxu0 %v440
        %v515 = vpop.f32.mrf.mxu0
        %v516 = vadd.f32 0.0, %v515
        %517 = vmatmul.f32.gmra.mxu0 %v441
        %v518 = vpop.f32.mrf.mxu0
        %v519 = vadd.f32 0.0, %v518
        %520 = vmatmul.f32.gmra.mxu0 %v442
        %v521 = vpop.f32.mrf.mxu0
        %v522 = vadd.f32 0.0, %v521
        %523 = vdwg.mxu0
        %v524 = vld [vmem:[#allocation2] sm:$0xff]
        %v525 = vld [vmem:[#allocation2 + $0x8] sm:$0xff]
        %v526 = vld [vmem:[#allocation2 + $0x10] sm:$0xff]
        %v527 = vld [vmem:[#allocation2 + $0x18] sm:$0xff]
        %v528 = vld [vmem:[#allocation2 + $0x20] sm:$0xff]
        %v529 = vld [vmem:[#allocation2 + $0x28] sm:$0xff]
        %v530 = vld [vmem:[#allocation2 + $0x30] sm:$0xff]
        %v531 = vld [vmem:[#allocation2 + $0x38] sm:$0xff]
        %v532 = vld [vmem:[#allocation2 + $0x40] sm:$0xff]
        %v533 = vld [vmem:[#allocation2 + $0x48] sm:$0xff]
        %v534 = vld [vmem:[#allocation2 + $0x50] sm:$0xff]
        %v535 = vld [vmem:[#allocation2 + $0x58] sm:$0xff]
        %v536 = vld [vmem:[#allocation2 + $0x60] sm:$0xff]
        %v537 = vld [vmem:[#allocation2 + $0x68] sm:$0xff]
        %v538 = vld [vmem:[#allocation2 + $0x70] sm:$0xff]
        %v539 = vld [vmem:[#allocation2 + $0x78] sm:$0xff]
        %v540 = vadd.f32 %v524, %v477
        %v541 = vadd.f32 %v525, %v480
        %v542 = vadd.f32 %v526, %v483
        %v543 = vadd.f32 %v527, %v486
        %v544 = vadd.f32 %v528, %v489
        %v545 = vadd.f32 %v529, %v492
        %v546 = vadd.f32 %v530, %v495
        %v547 = vadd.f32 %v531, %v498
        %v548 = vadd.f32 %v532, %v501
        %v549 = vadd.f32 %v533, %v504
        %v550 = vadd.f32 %v534, %v507
        %v551 = vadd.f32 %v535, %v510
        %v552 = vadd.f32 %v536, %v513
        %v553 = vadd.f32 %v537, %v516
        %v554 = vadd.f32 %v538, %v519
        %v555 = vadd.f32 %v539, %v522
        %vm556 = vcmask 261120
        %557 = vst.msk [vmem:[%s243] sm:$0xff] %vm556, %v540
        %558 = vst.msk [vmem:[%s243 + $0x8] sm:$0xff] %vm556, %v541
        %559 = vst.msk [vmem:[%s243 + $0x10] sm:$0xff] %vm556, %v542
        %560 = vst.msk [vmem:[%s243 + $0x18] sm:$0xff] %vm556, %v543
        %561 = vst.msk [vmem:[%s243 + $0x20] sm:$0xff] %vm556, %v544
        %562 = vst.msk [vmem:[%s243 + $0x28] sm:$0xff] %vm556, %v545
        %563 = vst.msk [vmem:[%s243 + $0x30] sm:$0xff] %vm556, %v546
        %564 = vst.msk [vmem:[%s243 + $0x38] sm:$0xff] %vm556, %v547
        %565 = vst.msk [vmem:[%s243 + $0x40] sm:$0xff] %vm556, %v548
        %566 = vst.msk [vmem:[%s243 + $0x48] sm:$0xff] %vm556, %v549
        %567 = vst.msk [vmem:[%s243 + $0x50] sm:$0xff] %vm556, %v550
        %568 = vst.msk [vmem:[%s243 + $0x58] sm:$0xff] %vm556, %v551
        %569 = vst.msk [vmem:[%s243 + $0x60] sm:$0xff] %vm556, %v552
        %570 = vst.msk [vmem:[%s243 + $0x68] sm:$0xff] %vm556, %v553
        %571 = vst.msk [vmem:[%s243 + $0x70] sm:$0xff] %vm556, %v554
        %572 = vst.msk [vmem:[%s243 + $0x78] sm:$0xff] %vm556, %v555
        %s573 = smul.u32 16, %s20
        %p574 = scmp.lt.s32.totalorder %s21, 1
        %s575 = scalar_select %p574, %s21, 1
        %p576 = scmp.lt.s32.totalorder %s573, 15
        %s577 = scalar_select %p576, %s573, 15
        %s578 = smul.addr %s575, 16
        %s579 = sadd.s32 %s577, %s578
        %s580 = smul.addr %s579, 8
        %s581 = scalar_lea.vmem %s3, %s580
        // Predicated region
        $region41: #{forward.1} parent=31 // pred_check
          %p582 = pneg %p123
        $region42: #{forward.1} parent=31 // pred_check_branch
          %584 = sbr.rel (%p582) target = $region44
        $region43: #{forward.1} parent=31 // pred_region
          %s585 = smul.u32 16, %s20
        $region44: #{forward.1} parent=31 // pred_fallthru
          _
      $region32: #{forward.1} parent=5 // pred_fallthru
        _
      %p586 = scmp.le.s32.totalorder 2, %s11
      // Predicated region
      $region45: #{forward.1} parent=5 // pred_check
        %p587 = pneg %p586
      $region46: #{forward.1} parent=5 // pred_check_branch
        %589 = sbr.rel (%p587) target = $region48
      $region47: #{forward.1} parent=5 // pred_region
        %s590 = ssub.s32 %s11, 2
        // Predicated region
        $region49: #{forward.1} parent=47 // pred_check
          %p591 = pneg %p129
        $region50: #{forward.1} parent=47 // pred_check_branch
          %593 = sbr.rel (%p591) target = $region52
        $region51: #{forward.1} parent=47 // pred_region
          %s594 = smul.u32 16, %s22
          %p595 = scmp.lt.s32.totalorder %s23, 1
          %s596 = scalar_select %p595, %s23, 1
          %p597 = scmp.lt.s32.totalorder %s594, 15
          %s598 = scalar_select %p597, %s594, 15
          %s599 = smul.addr %s596, 16
          %s600 = sadd.s32 %s598, %s599
          %s601 = smul.addr %s600, 8
          %s602 = scalar_lea.vmem %s3, %s601
        $region52: #{forward.1} parent=47 // pred_fallthru
          _
      $region48: #{forward.1} parent=5 // pred_fallthru
        _
    $region6: #{forward.1} parent=1 // loop_footer
      %s15 = sadd.s32 1, %s11
    $region7: #{forward.1} parent=1 // loop_footer_branch
      %10 = sbr.rel target = $region3
    $region8: #{forward.1} parent=1 // loop_exit
      _
    %603 = vsyncpa [#allocation3], 1
    %s604 = scalar_lea.sflag [#allocation3], 1
    %605 = vsyncpa %s604, 1
    %606 = vsyncpa [#allocation5], 1

</llo_original>
